<compile_context>
chip_gen: v6e
topology: v6e:2x2x1
jax: 0.10.0
libtpu: 0.0.40
codegen_flags: <defaults>
</compile_context>

<pallas_src>
import jax
import jax.numpy as jnp
from jax.experimental import pallas as pl
from jax.experimental.pallas import tpu as pltpu


def _add_kernel(a_ref, b_ref, o_ref):
    # Elementwise add on whole (tiny) VMEM-resident operands.
    # Broadcasting of b and the cast to the promoted output dtype happen
    # here on the VPU — no wrapper-side broadcast_to / astype ops.
    o_ref[...] = (a_ref[...] + b_ref[...]).astype(o_ref.dtype)


def pattern_module_forward(add1, add2):
    """Mirrors PatternModule.forward: add1.reshape([7, 7]) + add2."""
    a = jnp.reshape(add1, (7, 7))   # metadata-only row-major reshape (glue)
    b = jnp.asarray(add2)           # keep original shape; broadcast in-kernel
    out_dtype = jnp.promote_types(a.dtype, b.dtype)

    return pl.pallas_call(
        _add_kernel,
        out_shape=jax.ShapeDtypeStruct((7, 7), out_dtype),
        # Whole-array VMEM specs: single invocation, no grid, no pipelining.
        in_specs=[
            pl.BlockSpec(memory_space=pltpu.MemorySpace.VMEM),
            pl.BlockSpec(memory_space=pltpu.MemorySpace.VMEM),
        ],
        out_specs=pl.BlockSpec(memory_space=pltpu.MemorySpace.VMEM),
    )(a, b)


if __name__ == "__main__":
    key = jax.random.PRNGKey(0)
    k1, k2 = jax.random.split(key)

    # add1 is any tensor with 49 elements (it gets reshaped to [7, 7]);
    # add2 is broadcast-compatible with [7, 7].
    add1 = jax.random.normal(k1, (49,), dtype=jnp.float32)
    add2 = jax.random.normal(k2, (7, 7), dtype=jnp.float32)

    out = pattern_module_forward(add1, add2)
    jax.block_until_ready(out)

    # Correctness check against the pure-JAX reference.
    ref = jnp.reshape(add1, (7, 7)) + add2
    assert out.shape == (7, 7)
    assert jnp.allclose(out, ref, atol=1e-6, rtol=1e-6)

    print("KERNEL_OK")
</pallas_src>

<mosaic_0001>
module attributes {stable_mosaic.version = 11 : i64} {
  func.func @_add_kernel(%arg0: memref<7x7xf32, #tpu.memory_space<vmem>>, %arg1: memref<7x7xf32, #tpu.memory_space<vmem>>, %arg2: memref<7x7xf32, #tpu.memory_space<vmem>>) attributes {dimension_semantics = [], scalar_prefetch = 0 : i64, scratch_operands = 0 : i64, tpu.core_type = #tpu.core_type<tc>} {
    %c0 = arith.constant 0 : index
    %c0_0 = arith.constant 0 : index
    %0 = vector.load %arg0[%c0, %c0_0] : memref<7x7xf32, #tpu.memory_space<vmem>>, vector<7x7xf32>
    %c0_1 = arith.constant 0 : index
    %c0_2 = arith.constant 0 : index
    %1 = vector.load %arg1[%c0_1, %c0_2] : memref<7x7xf32, #tpu.memory_space<vmem>>, vector<7x7xf32>
    %2 = arith.addf %0, %1 : vector<7x7xf32>
    %c0_3 = arith.constant 0 : index
    %c0_4 = arith.constant 0 : index
    %3 = vector.load %arg2[%c0_3, %c0_4] : memref<7x7xf32, #tpu.memory_space<vmem>>, vector<7x7xf32>
    tpu.vector_store %arg2[%c0_3, %c0_4], %2 {strides = array<i32>} : memref<7x7xf32, #tpu.memory_space<vmem>>, vector<7x7xf32>,
    return
  }
}

</mosaic_0001>

<llo_original>
// kernel: tpu_custom_call.1
$region0: #{tpu_custom_call.1}
  #allocation0 [shape = 'u32[]', space=smem, size = 0x4, offset = 0x4, fixed_abs, tag = 'smem constant byte address 0x4 - core index']
  #allocation1 [shape = 'u32[144,128]{1,0:T(1,128)}', space=vmem, size = 0x12000, scoped, tag = 'internal scratch']
  %s0 = inlined_call_operand.hbm [shape: f32[7,7], index: 0, kind: input, shape index: {}]
  %s1 = inlined_call_operand.hbm [shape: f32[7,7], index: 1, kind: input, shape index: {}]
  %s2 = inlined_call_operand.hbm [shape: f32[7,7], index: 2, kind: output, shape index: {}]
  %s3 = sld [smem:[#allocation0]]
  $region26: #{tpu_custom_call.1} parent=0
    _
  %s5 = ssub.s32 1, %s3
  %s6 = scalar_select 0, %s5, %s3
  $region1: #{tpu_custom_call.1} parent=0
    #allocation2 [shape = 'u8[4096]{0}', space=vmem, size = 0x1000, scoped, tag = 'input window, operand 0, single buffered']
    #allocation3 [shape = 's32[1]{0}', space=sflag, size = 0x4, scoped, tag = 'scoped memory for tpu_custom_call.1']
    #allocation4 [shape = 's32[1]{0}', space=sflag, size = 0x4, scoped, tag = 'scoped memory for tpu_custom_call.1']
    #allocation5 [shape = 'u8[4096]{0}', space=vmem, size = 0x1000, scoped, tag = 'input window, operand 1, single buffered']
    #allocation6 [shape = 's32[1]{0}', space=sflag, size = 0x4, scoped, tag = 'scoped memory for tpu_custom_call.1']
    #allocation7 [shape = 'u8[4096]{0}', space=vmem, size = 0x1000, scoped, tag = 'output window, operand 0, single buffered']
    %7 = vsyncpa [#allocation3], 0
    %8 = vsyncpa [#allocation6], 0
    %9 = vsyncpa [#allocation4], 0
    // Predicated region
    $region2: #{tpu_custom_call.1} parent=1 // pred_check
      _
    $region3: #{tpu_custom_call.1} parent=1 // pred_check_branch
      %11 = sbr.rel (0) target = $region5
    $region4: #{tpu_custom_call.1} parent=1 // pred_region
      %s13 = ssub.s32 128, 128
      %14 = vsyncadd [#allocation3], %s13
      %s16 = sshll.u32 [#allocation2], 4
      %s17 = int_to_ptr.vmem [resolvable:$true] %s16
      %19 = dma.hbm_to_vmem [thread:$0]  %s0, 128, %s17, [#allocation3]
    $region5: #{tpu_custom_call.1} parent=1 // pred_fallthru
      _
    // Predicated region
    $region6: #{tpu_custom_call.1} parent=1 // pred_check
      _
    $region7: #{tpu_custom_call.1} parent=1 // pred_check_branch
      %21 = sbr.rel (0) target = $region9
    $region8: #{tpu_custom_call.1} parent=1 // pred_region
      %s23 = ssub.s32 128, 128
      %24 = vsyncadd [#allocation6], %s23
      %s26 = sshll.u32 [#allocation5], 4
      %s27 = int_to_ptr.vmem [resolvable:$true] %s26
      %29 = dma.hbm_to_vmem [thread:$0]  %s1, 128, %s27, [#allocation6]
    $region9: #{tpu_custom_call.1} parent=1 // pred_fallthru
      _
    // Predicated region
    $region10: #{tpu_custom_call.1} parent=1 // pred_check
      _
    $region11: #{tpu_custom_call.1} parent=1 // pred_check_branch
      %31 = sbr.rel (0) target = $region13
    $region12: #{tpu_custom_call.1} parent=1 // pred_region
      %32 = dma.done [#allocation3], 128
    $region13: #{tpu_custom_call.1} parent=1 // pred_fallthru
      _
    // Predicated region
    $region14: #{tpu_custom_call.1} parent=1 // pred_check
      _
    $region15: #{tpu_custom_call.1} parent=1 // pred_check_branch
      %34 = sbr.rel (0) target = $region17
    $region16: #{tpu_custom_call.1} parent=1 // pred_region
      %35 = dma.done [#allocation6], 128
    $region17: #{tpu_custom_call.1} parent=1 // pred_fallthru
      _
    %v36 = vld [vmem:[#allocation2] sm:$0x7f]
    %v37 = vld [vmem:[#allocation5] sm:$0x7f]
    %v38 = vadd.f32 %v36, %v37
    %vm39 = vcmask 55296
    %40 = vst.msk [vmem:[#allocation7] sm:$0x7f] %vm39, %v38
    // Predicated region
    $region18: #{tpu_custom_call.1} parent=1 // pred_check
      _
    $region19: #{tpu_custom_call.1} parent=1 // pred_check_branch
      %42 = sbr.rel (0) target = $region21
    $region20: #{tpu_custom_call.1} parent=1 // pred_region
      %s44 = ssub.s32 128, 128
      %45 = vsyncadd [#allocation4], %s44
      %s47 = sshll.u32 [#allocation7], 4
      %s48 = int_to_ptr.vmem [resolvable:$true] %s47
      %50 = dma.vmem_to_hbm [thread:$0]  %s48, 128, %s2, [#allocation4]
    $region21: #{tpu_custom_call.1} parent=1 // pred_fallthru
      _
    // Predicated region
    $region22: #{tpu_custom_call.1} parent=1 // pred_check
      _
    $region23: #{tpu_custom_call.1} parent=1 // pred_check_branch
      %52 = sbr.rel (0) target = $region25
    $region24: #{tpu_custom_call.1} parent=1 // pred_region
      %53 = dma.done [#allocation4], 128
    $region25: #{tpu_custom_call.1} parent=1 // pred_fallthru
      _
    %54 = vsyncpa [#allocation3], 1
    %55 = vsyncpa [#allocation6], 1
    %56 = vsyncpa [#allocation4], 1

</llo_original>
